<compile_context>
chip_gen: v6e
topology: v6e:2x2x1
jax: 0.10.0
libtpu: 0.0.40
codegen_flags: <defaults>
</compile_context>

<pallas_src>
import jax
import jax.numpy as jnp
from jax.experimental import pallas as pl
from jax.experimental.pallas import tpu as pltpu

BN_EPS = 1e-5
LANE = 128


def _round_up(x, m):
    return ((x + m - 1) // m) * m


def _mlp_kernel(x_ref, w1_ref, ws_ref, vec_ref, out_ref):
    """Fused fc->BN(train)->ReLU x3 + final fc; single program, all in VMEM.

    x_ref   : (B, Fpad)        flattened input (feature dim zero-padded)
    w1_ref  : (Fpad, Hpad)     layer-1 weight
    ws_ref  : (3, Hpad, Hpad)  stacked zero-padded weights of layers 2..4
    vec_ref : (16, Hpad)       packed per-layer vectors, rows:
                               0:b1 1:g1 2:be1 3:b2 4:g2 5:be2
                               6:b3 7:g3 8:be3 9:b4 (remaining rows zero)
    out_ref : (B, Hpad)        lane-dense output (real logits in cols [:10])
    """
    inv_b = 1.0 / x_ref.shape[0]
    v = vec_ref[...]

    def bn_relu(h, g_row, be_row):
        # One-pass BN statistics: mean and E[h^2] in a single sweep over h.
        s1 = jnp.sum(h, axis=0, keepdims=True)
        s2 = jnp.sum(h * h, axis=0, keepdims=True)
        mean = s1 * inv_b
        var = jnp.maximum(s2 * inv_b - mean * mean, 0.0)
        y = (h - mean) * jax.lax.rsqrt(var + BN_EPS) * g_row + be_row
        return jnp.maximum(y, 0.0)

    h = x_ref[...]
    h = jnp.dot(h, w1_ref[...], preferred_element_type=jnp.float32) + v[0:1, :]
    h = bn_relu(h, v[1:2, :], v[2:3, :])
    h = jnp.dot(h, ws_ref[0], preferred_element_type=jnp.float32) + v[3:4, :]
    h = bn_relu(h, v[4:5, :], v[5:6, :])
    h = jnp.dot(h, ws_ref[1], preferred_element_type=jnp.float32) + v[6:7, :]
    h = bn_relu(h, v[7:8, :], v[8:9, :])
    # Lane-dense store: full (B, Hpad) tile; wrapper slices the real logits.
    out_ref[...] = (
        jnp.dot(h, ws_ref[2], preferred_element_type=jnp.float32) + v[9:10, :]
    )


def pack_params(params, input_dim, fc1_hidden, fc2_hidden, fc3_hidden, out_dim=10):
    """One-time packing: pad all widths to 128 lanes, stack weights, pack vectors."""
    hpad = _round_up(max(fc1_hidden, fc2_hidden, fc3_hidden, out_dim, LANE), LANE)
    fpad = _round_up(input_dim, LANE)

    def pad2(w, rows, cols):
        return jnp.pad(w, ((0, rows - w.shape[0]), (0, cols - w.shape[1])))

    w1 = pad2(params["w1"], fpad, hpad)
    ws = jnp.stack(
        [
            pad2(params["w2"], hpad, hpad),
            pad2(params["w3"], hpad, hpad),
            pad2(params["w4"], hpad, hpad),
        ],
        axis=0,
    )

    def pad_row(v):
        v = v.reshape(1, -1)
        return jnp.pad(v, ((0, 0), (0, hpad - v.shape[1])))

    rows = [
        params["b1"], params["g1"], params["be1"],
        params["b2"], params["g2"], params["be2"],
        params["b3"], params["g3"], params["be3"],
        params["b4"],
    ]
    vec = jnp.concatenate([pad_row(r) for r in rows], axis=0)
    vec = jnp.pad(vec, ((0, 16 - vec.shape[0]), (0, 0)))  # tile-clean row count

    return {"w1": w1, "ws": ws, "vec": vec,
            "fpad": fpad, "hpad": hpad, "out_dim": out_dim}


def simple_mlp_forward(x_nchw, packed):
    """Runs the fused MLP kernel. x_nchw: [B, C, H, W] float32."""
    B = x_nchw.shape[0]
    x2d = x_nchw.reshape(B, -1)  # mirrors x.view(x.size(0), -1)
    if x2d.shape[1] != packed["fpad"]:
        x2d = jnp.pad(x2d, ((0, 0), (0, packed["fpad"] - x2d.shape[1])))

    vmem = pl.BlockSpec(memory_space=pltpu.MemorySpace.VMEM)
    out = pl.pallas_call(
        _mlp_kernel,
        out_shape=jax.ShapeDtypeStruct((B, packed["hpad"]), jnp.float32),
        in_specs=[vmem, vmem, vmem, vmem],
        out_specs=vmem,
        compiler_params=pltpu.CompilerParams(vmem_limit_bytes=32 * 1024 * 1024),
    )(x2d, packed["w1"], packed["ws"], packed["vec"])
    return out[:, : packed["out_dim"]]


def init_params(key, input_dim, fc1_hidden, fc2_hidden, fc3_hidden, out_dim=10):
    """Deterministic synthetic parameters (weights stored as [in, out])."""
    keys = jax.random.split(key, 8)

    def linear_init(kw, kb, fan_in, fan_out):
        bound = 1.0 / jnp.sqrt(fan_in)
        w = jax.random.uniform(kw, (fan_in, fan_out), jnp.float32, -bound, bound)
        b = jax.random.uniform(kb, (1, fan_out), jnp.float32, -bound, bound)
        return w, b

    w1, b1 = linear_init(keys[0], keys[1], input_dim, fc1_hidden)
    w2, b2 = linear_init(keys[2], keys[3], fc1_hidden, fc2_hidden)
    w3, b3 = linear_init(keys[4], keys[5], fc2_hidden, fc3_hidden)
    w4, b4 = linear_init(keys[6], keys[7], fc3_hidden, out_dim)

    return {
        "w1": w1, "b1": b1,
        "g1": jnp.ones((1, fc1_hidden), jnp.float32),
        "be1": jnp.zeros((1, fc1_hidden), jnp.float32),
        "w2": w2, "b2": b2,
        "g2": jnp.ones((1, fc2_hidden), jnp.float32),
        "be2": jnp.zeros((1, fc2_hidden), jnp.float32),
        "w3": w3, "b3": b3,
        "g3": jnp.ones((1, fc3_hidden), jnp.float32),
        "be3": jnp.zeros((1, fc3_hidden), jnp.float32),
        "w4": w4, "b4": b4,
    }


def reference_forward(x_nchw, params):
    """Pure-JAX reference mirroring the PyTorch module (training-mode BN)."""
    x = x_nchw.reshape(x_nchw.shape[0], -1)

    def bn_relu(h, g, be):
        mean = jnp.mean(h, axis=0, keepdims=True)
        var = jnp.mean((h - mean) ** 2, axis=0, keepdims=True)
        return jnp.maximum((h - mean) * jax.lax.rsqrt(var + BN_EPS) * g + be, 0.0)

    h = bn_relu(x @ params["w1"] + params["b1"], params["g1"], params["be1"])
    h = bn_relu(h @ params["w2"] + params["b2"], params["g2"], params["be2"])
    h = bn_relu(h @ params["w3"] + params["b3"], params["g3"], params["be3"])
    return h @ params["w4"] + params["b4"]


if __name__ == "__main__":
    # Small shapes consistent with the module: NCHW input flattened to input_dim.
    B, C, H, W = 8, 4, 8, 8            # input_dim = 256; B=8 is sublane-aligned
    fc1_hidden, fc2_hidden, fc3_hidden = 128, 64, 32

    key = jax.random.PRNGKey(0)
    kx, kp = jax.random.split(key)
    x = jax.random.normal(kx, (B, C, H, W), jnp.float32)

    params = init_params(kp, C * H * W, fc1_hidden, fc2_hidden, fc3_hidden)
    packed = pack_params(params, C * H * W, fc1_hidden, fc2_hidden, fc3_hidden)

    out = simple_mlp_forward(x, packed)
    out = jax.block_until_ready(out)

    ref = reference_forward(x, params)
    assert out.shape == (B, 10)
    assert jnp.allclose(out, ref, atol=1e-4, rtol=1e-4), "mismatch vs JAX reference"

    print("KERNEL_OK")
</pallas_src>

<mosaic_0001>
module attributes {stable_mosaic.version = 11 : i64} {
  func.func @_mlp_kernel(%arg0: memref<8x256xf32, #tpu.memory_space<vmem>>, %arg1: memref<256x128xf32, #tpu.memory_space<vmem>>, %arg2: memref<3x128x128xf32, #tpu.memory_space<vmem>>, %arg3: memref<16x128xf32, #tpu.memory_space<vmem>>, %arg4: memref<8x128xf32, #tpu.memory_space<vmem>>) attributes {dimension_semantics = [], scalar_prefetch = 0 : i64, scratch_operands = 0 : i64, tpu.core_type = #tpu.core_type<tc>} {
    %c0 = arith.constant 0 : index
    %c0_0 = arith.constant 0 : index
    %0 = vector.load %arg3[%c0, %c0_0] : memref<16x128xf32, #tpu.memory_space<vmem>>, vector<16x128xf32>
    %c0_1 = arith.constant 0 : index
    %c0_2 = arith.constant 0 : index
    %1 = vector.load %arg0[%c0_1, %c0_2] : memref<8x256xf32, #tpu.memory_space<vmem>>, vector<8x256xf32>
    %c0_3 = arith.constant 0 : index
    %c0_4 = arith.constant 0 : index
    %2 = vector.load %arg1[%c0_3, %c0_4] : memref<256x128xf32, #tpu.memory_space<vmem>>, vector<256x128xf32>
    %cst = arith.constant dense<0.000000e+00> : vector<8x128xf32>
    %3 = tpu.matmul %1, %2, %cst {dimension_numbers = #tpu.dot_dimension_numbers<[1], [0], [0], [1], [0, 0, 1, 1], [], []>} : vector<8x256xf32>, vector<256x128xf32>, vector<8x128xf32> -> vector<8x128xf32>
    %4 = vector.extract_strided_slice %0 {offsets = [0, 0], sizes = [1, 128], strides = [1, 1]} : vector<16x128xf32> to vector<1x128xf32>
    %5 = vector.broadcast %4 : vector<1x128xf32> to vector<8x128xf32>
    %6 = arith.addf %3, %5 : vector<8x128xf32>
    %7 = vector.extract_strided_slice %0 {offsets = [1, 0], sizes = [1, 128], strides = [1, 1]} : vector<16x128xf32> to vector<1x128xf32>
    %8 = vector.extract_strided_slice %0 {offsets = [2, 0], sizes = [1, 128], strides = [1, 1]} : vector<16x128xf32> to vector<1x128xf32>
    %cst_5 = arith.constant dense<0.000000e+00> : vector<128xf32>
    %9 = vector.multi_reduction <add>, %6, %cst_5 [0] : vector<8x128xf32> to vector<128xf32>
    %10 = vector.shape_cast %9 : vector<128xf32> to vector<1x128xf32>
    %11 = arith.mulf %6, %6 : vector<8x128xf32>
    %cst_6 = arith.constant dense<0.000000e+00> : vector<128xf32>
    %12 = vector.multi_reduction <add>, %11, %cst_6 [0] : vector<8x128xf32> to vector<128xf32>
    %13 = vector.shape_cast %12 : vector<128xf32> to vector<1x128xf32>
    %cst_7 = arith.constant 1.250000e-01 : f32
    %14 = vector.broadcast %cst_7 : f32 to vector<1x128xf32>
    %15 = arith.mulf %10, %14 : vector<1x128xf32>
    %cst_8 = arith.constant 1.250000e-01 : f32
    %16 = vector.broadcast %cst_8 : f32 to vector<1x128xf32>
    %17 = arith.mulf %13, %16 : vector<1x128xf32>
    %18 = arith.mulf %15, %15 : vector<1x128xf32>
    %19 = arith.subf %17, %18 : vector<1x128xf32>
    %cst_9 = arith.constant 0.000000e+00 : f32
    %20 = vector.broadcast %cst_9 : f32 to vector<1x128xf32>
    %21 = arith.maximumf %19, %20 : vector<1x128xf32>
    %22 = vector.broadcast %15 : vector<1x128xf32> to vector<8x128xf32>
    %23 = arith.subf %6, %22 : vector<8x128xf32>
    %cst_10 = arith.constant 9.99999974E-6 : f32
    %24 = vector.broadcast %cst_10 : f32 to vector<1x128xf32>
    %25 = arith.addf %21, %24 : vector<1x128xf32>
    %26 = math.rsqrt %25 : vector<1x128xf32>
    %27 = vector.broadcast %26 : vector<1x128xf32> to vector<8x128xf32>
    %28 = arith.mulf %23, %27 : vector<8x128xf32>
    %29 = vector.broadcast %7 : vector<1x128xf32> to vector<8x128xf32>
    %30 = arith.mulf %28, %29 : vector<8x128xf32>
    %31 = vector.broadcast %8 : vector<1x128xf32> to vector<8x128xf32>
    %32 = arith.addf %30, %31 : vector<8x128xf32>
    %cst_11 = arith.constant 0.000000e+00 : f32
    %33 = vector.broadcast %cst_11 : f32 to vector<8x128xf32>
    %34 = arith.maximumf %32, %33 : vector<8x128xf32>
    %c0_12 = arith.constant 0 : index
    %c0_13 = arith.constant 0 : index
    %c0_14 = arith.constant 0 : index
    %35 = vector.load %arg2[%c0_12, %c0_13, %c0_14] : memref<3x128x128xf32, #tpu.memory_space<vmem>>, vector<1x128x128xf32>
    %36 = vector.shape_cast %35 : vector<1x128x128xf32> to vector<128x128xf32>
    %cst_15 = arith.constant dense<0.000000e+00> : vector<8x128xf32>
    %37 = tpu.matmul %34, %36, %cst_15 {dimension_numbers = #tpu.dot_dimension_numbers<[1], [0], [0], [1], [0, 0, 1, 1], [], []>} : vector<8x128xf32>, vector<128x128xf32>, vector<8x128xf32> -> vector<8x128xf32>
    %38 = vector.extract_strided_slice %0 {offsets = [3, 0], sizes = [1, 128], strides = [1, 1]} : vector<16x128xf32> to vector<1x128xf32>
    %39 = vector.broadcast %38 : vector<1x128xf32> to vector<8x128xf32>
    %40 = arith.addf %37, %39 : vector<8x128xf32>
    %41 = vector.extract_strided_slice %0 {offsets = [4, 0], sizes = [1, 128], strides = [1, 1]} : vector<16x128xf32> to vector<1x128xf32>
    %42 = vector.extract_strided_slice %0 {offsets = [5, 0], sizes = [1, 128], strides = [1, 1]} : vector<16x128xf32> to vector<1x128xf32>
    %cst_16 = arith.constant dense<0.000000e+00> : vector<128xf32>
    %43 = vector.multi_reduction <add>, %40, %cst_16 [0] : vector<8x128xf32> to vector<128xf32>
    %44 = vector.shape_cast %43 : vector<128xf32> to vector<1x128xf32>
    %45 = arith.mulf %40, %40 : vector<8x128xf32>
    %cst_17 = arith.constant dense<0.000000e+00> : vector<128xf32>
    %46 = vector.multi_reduction <add>, %45, %cst_17 [0] : vector<8x128xf32> to vector<128xf32>
    %47 = vector.shape_cast %46 : vector<128xf32> to vector<1x128xf32>
    %cst_18 = arith.constant 1.250000e-01 : f32
    %48 = vector.broadcast %cst_18 : f32 to vector<1x128xf32>
    %49 = arith.mulf %44, %48 : vector<1x128xf32>
    %cst_19 = arith.constant 1.250000e-01 : f32
    %50 = vector.broadcast %cst_19 : f32 to vector<1x128xf32>
    %51 = arith.mulf %47, %50 : vector<1x128xf32>
    %52 = arith.mulf %49, %49 : vector<1x128xf32>
    %53 = arith.subf %51, %52 : vector<1x128xf32>
    %cst_20 = arith.constant 0.000000e+00 : f32
    %54 = vector.broadcast %cst_20 : f32 to vector<1x128xf32>
    %55 = arith.maximumf %53, %54 : vector<1x128xf32>
    %56 = vector.broadcast %49 : vector<1x128xf32> to vector<8x128xf32>
    %57 = arith.subf %40, %56 : vector<8x128xf32>
    %cst_21 = arith.constant 9.99999974E-6 : f32
    %58 = vector.broadcast %cst_21 : f32 to vector<1x128xf32>
    %59 = arith.addf %55, %58 : vector<1x128xf32>
    %60 = math.rsqrt %59 : vector<1x128xf32>
    %61 = vector.broadcast %60 : vector<1x128xf32> to vector<8x128xf32>
    %62 = arith.mulf %57, %61 : vector<8x128xf32>
    %63 = vector.broadcast %41 : vector<1x128xf32> to vector<8x128xf32>
    %64 = arith.mulf %62, %63 : vector<8x128xf32>
    %65 = vector.broadcast %42 : vector<1x128xf32> to vector<8x128xf32>
    %66 = arith.addf %64, %65 : vector<8x128xf32>
    %cst_22 = arith.constant 0.000000e+00 : f32
    %67 = vector.broadcast %cst_22 : f32 to vector<8x128xf32>
    %68 = arith.maximumf %66, %67 : vector<8x128xf32>
    %c1 = arith.constant 1 : index
    %c0_23 = arith.constant 0 : index
    %c0_24 = arith.constant 0 : index
    %69 = vector.load %arg2[%c1, %c0_23, %c0_24] : memref<3x128x128xf32, #tpu.memory_space<vmem>>, vector<1x128x128xf32>
    %70 = vector.shape_cast %69 : vector<1x128x128xf32> to vector<128x128xf32>
    %cst_25 = arith.constant dense<0.000000e+00> : vector<8x128xf32>
    %71 = tpu.matmul %68, %70, %cst_25 {dimension_numbers = #tpu.dot_dimension_numbers<[1], [0], [0], [1], [0, 0, 1, 1], [], []>} : vector<8x128xf32>, vector<128x128xf32>, vector<8x128xf32> -> vector<8x128xf32>
    %72 = vector.extract_strided_slice %0 {offsets = [6, 0], sizes = [1, 128], strides = [1, 1]} : vector<16x128xf32> to vector<1x128xf32>
    %73 = vector.broadcast %72 : vector<1x128xf32> to vector<8x128xf32>
    %74 = arith.addf %71, %73 : vector<8x128xf32>
    %75 = vector.extract_strided_slice %0 {offsets = [7, 0], sizes = [1, 128], strides = [1, 1]} : vector<16x128xf32> to vector<1x128xf32>
    %76 = vector.extract_strided_slice %0 {offsets = [8, 0], sizes = [1, 128], strides = [1, 1]} : vector<16x128xf32> to vector<1x128xf32>
    %cst_26 = arith.constant dense<0.000000e+00> : vector<128xf32>
    %77 = vector.multi_reduction <add>, %74, %cst_26 [0] : vector<8x128xf32> to vector<128xf32>
    %78 = vector.shape_cast %77 : vector<128xf32> to vector<1x128xf32>
    %79 = arith.mulf %74, %74 : vector<8x128xf32>
    %cst_27 = arith.constant dense<0.000000e+00> : vector<128xf32>
    %80 = vector.multi_reduction <add>, %79, %cst_27 [0] : vector<8x128xf32> to vector<128xf32>
    %81 = vector.shape_cast %80 : vector<128xf32> to vector<1x128xf32>
    %cst_28 = arith.constant 1.250000e-01 : f32
    %82 = vector.broadcast %cst_28 : f32 to vector<1x128xf32>
    %83 = arith.mulf %78, %82 : vector<1x128xf32>
    %cst_29 = arith.constant 1.250000e-01 : f32
    %84 = vector.broadcast %cst_29 : f32 to vector<1x128xf32>
    %85 = arith.mulf %81, %84 : vector<1x128xf32>
    %86 = arith.mulf %83, %83 : vector<1x128xf32>
    %87 = arith.subf %85, %86 : vector<1x128xf32>
    %cst_30 = arith.constant 0.000000e+00 : f32
    %88 = vector.broadcast %cst_30 : f32 to vector<1x128xf32>
    %89 = arith.maximumf %87, %88 : vector<1x128xf32>
    %90 = vector.broadcast %83 : vector<1x128xf32> to vector<8x128xf32>
    %91 = arith.subf %74, %90 : vector<8x128xf32>
    %cst_31 = arith.constant 9.99999974E-6 : f32
    %92 = vector.broadcast %cst_31 : f32 to vector<1x128xf32>
    %93 = arith.addf %89, %92 : vector<1x128xf32>
    %94 = math.rsqrt %93 : vector<1x128xf32>
    %95 = vector.broadcast %94 : vector<1x128xf32> to vector<8x128xf32>
    %96 = arith.mulf %91, %95 : vector<8x128xf32>
    %97 = vector.broadcast %75 : vector<1x128xf32> to vector<8x128xf32>
    %98 = arith.mulf %96, %97 : vector<8x128xf32>
    %99 = vector.broadcast %76 : vector<1x128xf32> to vector<8x128xf32>
    %100 = arith.addf %98, %99 : vector<8x128xf32>
    %cst_32 = arith.constant 0.000000e+00 : f32
    %101 = vector.broadcast %cst_32 : f32 to vector<8x128xf32>
    %102 = arith.maximumf %100, %101 : vector<8x128xf32>
    %c2 = arith.constant 2 : index
    %c0_33 = arith.constant 0 : index
    %c0_34 = arith.constant 0 : index
    %103 = vector.load %arg2[%c2, %c0_33, %c0_34] : memref<3x128x128xf32, #tpu.memory_space<vmem>>, vector<1x128x128xf32>
    %104 = vector.shape_cast %103 : vector<1x128x128xf32> to vector<128x128xf32>
    %cst_35 = arith.constant dense<0.000000e+00> : vector<8x128xf32>
    %105 = tpu.matmul %102, %104, %cst_35 {dimension_numbers = #tpu.dot_dimension_numbers<[1], [0], [0], [1], [0, 0, 1, 1], [], []>} : vector<8x128xf32>, vector<128x128xf32>, vector<8x128xf32> -> vector<8x128xf32>
    %106 = vector.extract_strided_slice %0 {offsets = [9, 0], sizes = [1, 128], strides = [1, 1]} : vector<16x128xf32> to vector<1x128xf32>
    %107 = vector.broadcast %106 : vector<1x128xf32> to vector<8x128xf32>
    %108 = arith.addf %105, %107 : vector<8x128xf32>
    %c0_36 = arith.constant 0 : index
    %c0_37 = arith.constant 0 : index
    %109 = vector.load %arg4[%c0_36, %c0_37] : memref<8x128xf32, #tpu.memory_space<vmem>>, vector<8x128xf32>
    tpu.vector_store %arg4[%c0_36, %c0_37], %108 {strides = array<i32>} : memref<8x128xf32, #tpu.memory_space<vmem>>, vector<8x128xf32>,
    return
  }
}

</mosaic_0001>

<llo_original>
// kernel: tpu_custom_call.1
$region0: #{tpu_custom_call.1}
  #allocation0 [shape = 'u32[]', space=smem, size = 0x4, offset = 0x4, fixed_abs, tag = 'smem constant byte address 0x4 - core index']
  #allocation1 [shape = 'u32[144,128]{1,0:T(1,128)}', space=vmem, size = 0x12000, scoped, tag = 'internal scratch']
  %s0 = inlined_call_operand.hbm [shape: f32[8,256], index: 0, kind: input, shape index: {}]
  %s1 = inlined_call_operand.hbm [shape: f32[256,128], index: 1, kind: input, shape index: {}]
  %s2 = inlined_call_operand.hbm [shape: f32[3,128,128], index: 2, kind: input, shape index: {}]
  %s3 = inlined_call_operand.hbm [shape: f32[16,128], index: 3, kind: input, shape index: {}]
  %s4 = inlined_call_operand.hbm [shape: f32[8,128], index: 4, kind: output, shape index: {}]
  %s5 = sld [smem:[#allocation0]]
  $region42: #{tpu_custom_call.1} parent=0
    _
  %s7 = ssub.s32 1, %s5
  %s8 = scalar_select 0, %s7, %s5
  $region1: #{tpu_custom_call.1} parent=0
    #allocation2 [shape = 'u8[8192]{0}', space=vmem, size = 0x2000, scoped, tag = 'input window, operand 0, single buffered']
    #allocation3 [shape = 's32[1]{0}', space=sflag, size = 0x4, scoped, tag = 'scoped memory for tpu_custom_call.1']
    #allocation4 [shape = 's32[1]{0}', space=sflag, size = 0x4, scoped, tag = 'scoped memory for tpu_custom_call.1']
    #allocation5 [shape = 'u8[131072]{0}', space=vmem, size = 0x20000, scoped, tag = 'input window, operand 1, single buffered']
    #allocation6 [shape = 's32[1]{0}', space=sflag, size = 0x4, scoped, tag = 'scoped memory for tpu_custom_call.1']
    #allocation7 [shape = 'u8[196608]{0}', space=vmem, size = 0x30000, scoped, tag = 'input window, operand 2, single buffered']
    #allocation8 [shape = 'u8[8192]{0}', space=vmem, size = 0x2000, scoped, tag = 'input window, operand 3, single buffered']
    #allocation9 [shape = 's32[1]{0}', space=sflag, size = 0x4, scoped, tag = 'scoped memory for tpu_custom_call.1']
    #allocation10 [shape = 'u8[4096]{0}', space=vmem, size = 0x1000, scoped, tag = 'output window, operand 0, single buffered']
    %9 = vsyncpa [#allocation3], 0
    %10 = vsyncpa [#allocation6], 0
    %11 = vsyncpa [#allocation9], 0
    %12 = vsyncpa [#allocation4], 0
    // Predicated region
    $region2: #{tpu_custom_call.1} parent=1 // pred_check
      _
    $region3: #{tpu_custom_call.1} parent=1 // pred_check_branch
      %14 = sbr.rel (0) target = $region5
    $region4: #{tpu_custom_call.1} parent=1 // pred_region
      %s16 = ssub.s32 256, 256
      %17 = vsyncadd [#allocation3], %s16
      %s19 = sshll.u32 [#allocation2], 4
      %s20 = int_to_ptr.vmem [resolvable:$true] %s19
      %22 = dma.hbm_to_vmem [thread:$0]  %s0, 256, %s20, [#allocation3]
    $region5: #{tpu_custom_call.1} parent=1 // pred_fallthru
      _
    // Predicated region
    $region6: #{tpu_custom_call.1} parent=1 // pred_check
      _
    $region7: #{tpu_custom_call.1} parent=1 // pred_check_branch
      %24 = sbr.rel (0) target = $region9
    $region8: #{tpu_custom_call.1} parent=1 // pred_region
      %s26 = ssub.s32 4096, 4096
      %27 = vsyncadd [#allocation6], %s26
      %s28 = sshll.u32 [#allocation5], 4
      %s29 = int_to_ptr.vmem [resolvable:$true] %s28
      %34 = dma.hbm_to_vmem [thread:$0]  %s1, 4096, %s29, [#allocation6], 128, 128, 8
    $region9: #{tpu_custom_call.1} parent=1 // pred_fallthru
      _
    // Predicated region
    $region10: #{tpu_custom_call.1} parent=1 // pred_check
      _
    $region11: #{tpu_custom_call.1} parent=1 // pred_check_branch
      %36 = sbr.rel (0) target = $region13
    $region12: #{tpu_custom_call.1} parent=1 // pred_region
      %s38 = ssub.s32 6144, 6144
      %39 = vsyncadd [#allocation6], %s38
      %s40 = sshll.u32 [#allocation7], 4
      %s41 = int_to_ptr.vmem [resolvable:$true] %s40
      %46 = dma.hbm_to_vmem [thread:$0]  %s2, 6144, %s41, [#allocation6], 128, 128, 8
    $region13: #{tpu_custom_call.1} parent=1 // pred_fallthru
      _
    // Predicated region
    $region14: #{tpu_custom_call.1} parent=1 // pred_check
      _
    $region15: #{tpu_custom_call.1} parent=1 // pred_check_branch
      %48 = sbr.rel (0) target = $region17
    $region16: #{tpu_custom_call.1} parent=1 // pred_region
      %s50 = ssub.s32 256, 256
      %51 = vsyncadd [#allocation9], %s50
      %s52 = sshll.u32 [#allocation8], 4
      %s53 = int_to_ptr.vmem [resolvable:$true] %s52
      %58 = dma.hbm_to_vmem [thread:$0]  %s3, 256, %s53, [#allocation9], 128, 128, 8
    $region17: #{tpu_custom_call.1} parent=1 // pred_fallthru
      _
    // Predicated region
    $region18: #{tpu_custom_call.1} parent=1 // pred_check
      _
    $region19: #{tpu_custom_call.1} parent=1 // pred_check_branch
      %60 = sbr.rel (0) target = $region21
    $region20: #{tpu_custom_call.1} parent=1 // pred_region
      %61 = dma.done [#allocation3], 256
    $region21: #{tpu_custom_call.1} parent=1 // pred_fallthru
      _
    // Predicated region
    $region22: #{tpu_custom_call.1} parent=1 // pred_check
      _
    $region23: #{tpu_custom_call.1} parent=1 // pred_check_branch
      %63 = sbr.rel (0) target = $region25
    $region24: #{tpu_custom_call.1} parent=1 // pred_region
      %64 = dma.done [#allocation6], 4096
    $region25: #{tpu_custom_call.1} parent=1 // pred_fallthru
      _
    // Predicated region
    $region26: #{tpu_custom_call.1} parent=1 // pred_check
      _
    $region27: #{tpu_custom_call.1} parent=1 // pred_check_branch
      %66 = sbr.rel (0) target = $region29
    $region28: #{tpu_custom_call.1} parent=1 // pred_region
      %67 = dma.done [#allocation6], 6144
    $region29: #{tpu_custom_call.1} parent=1 // pred_fallthru
      _
    // Predicated region
    $region30: #{tpu_custom_call.1} parent=1 // pred_check
      _
    $region31: #{tpu_custom_call.1} parent=1 // pred_check_branch
      %69 = sbr.rel (0) target = $region33
    $region32: #{tpu_custom_call.1} parent=1 // pred_region
      %70 = dma.done [#allocation9], 256
    $region33: #{tpu_custom_call.1} parent=1 // pred_fallthru
      _
    %v71 = vld [vmem:[#allocation8] sm:$0xff]
    %v72 = vld [vmem:[#allocation8 + $0x8] sm:$0xff]
    %v73 = vld [vmem:[#allocation2] sm:$0xff]
    %v74 = vld [vmem:[#allocation2 + $0x8] sm:$0xff]
    %v75 = vld [vmem:[#allocation5] sm:$0xff]
    %v76 = vld [vmem:[#allocation5 + $0x8] sm:$0xff]
    %v77 = vld [vmem:[#allocation5 + $0x10] sm:$0xff]
    %v78 = vld [vmem:[#allocation5 + $0x18] sm:$0xff]
    %v79 = vld [vmem:[#allocation5 + $0x20] sm:$0xff]
    %v80 = vld [vmem:[#allocation5 + $0x28] sm:$0xff]
    %v81 = vld [vmem:[#allocation5 + $0x30] sm:$0xff]
    %v82 = vld [vmem:[#allocation5 + $0x38] sm:$0xff]
    %v83 = vld [vmem:[#allocation5 + $0x40] sm:$0xff]
    %v84 = vld [vmem:[#allocation5 + $0x48] sm:$0xff]
    %v85 = vld [vmem:[#allocation5 + $0x50] sm:$0xff]
    %v86 = vld [vmem:[#allocation5 + $0x58] sm:$0xff]
    %v87 = vld [vmem:[#allocation5 + $0x60] sm:$0xff]
    %v88 = vld [vmem:[#allocation5 + $0x68] sm:$0xff]
    %v89 = vld [vmem:[#allocation5 + $0x70] sm:$0xff]
    %v90 = vld [vmem:[#allocation5 + $0x78] sm:$0xff]
    %v91 = vld [vmem:[#allocation5 + $0x80] sm:$0xff]
    %v92 = vld [vmem:[#allocation5 + $0x88] sm:$0xff]
    %v93 = vld [vmem:[#allocation5 + $0x90] sm:$0xff]
    %v94 = vld [vmem:[#allocation5 + $0x98] sm:$0xff]
    %v95 = vld [vmem:[#allocation5 + $0xa0] sm:$0xff]
    %v96 = vld [vmem:[#allocation5 + $0xa8] sm:$0xff]
    %v97 = vld [vmem:[#allocation5 + $0xb0] sm:$0xff]
    %v98 = vld [vmem:[#allocation5 + $0xb8] sm:$0xff]
    %v99 = vld [vmem:[#allocation5 + $0xc0] sm:$0xff]
    %v100 = vld [vmem:[#allocation5 + $0xc8] sm:$0xff]
    %v101 = vld [vmem:[#allocation5 + $0xd0] sm:$0xff]
    %v102 = vld [vmem:[#allocation5 + $0xd8] sm:$0xff]
    %v103 = vld [vmem:[#allocation5 + $0xe0] sm:$0xff]
    %v104 = vld [vmem:[#allocation5 + $0xe8] sm:$0xff]
    %v105 = vld [vmem:[#allocation5 + $0xf0] sm:$0xff]
    %v106 = vld [vmem:[#allocation5 + $0xf8] sm:$0xff]
    %v107 = vlaneseq
    %v108 = vshrl.u32 %v107, 7
    %v109 = vsub.s32 0, %v108
    %v110 = vrot.slane %v71, %v109
    %111 = vmatprep.subr.mxu0 0.0
    %112 = vmatpush1.msra.mxu0 %v90
    %113 = vmatprep.subr.mxu0 0.0
    %114 = vmatpush1.msra.mxu0 %v89
    %115 = vmatprep.subr.mxu0 0.0
    %116 = vmatpush1.msra.mxu0 %v88
    %117 = vmatprep.subr.mxu0 0.0
    %118 = vmatpush1.msra.mxu0 %v87
    %119 = vmatprep.subr.mxu0 0.0
    %120 = vmatpush1.msra.mxu0 %v86
    %121 = vmatprep.subr.mxu0 0.0
    %122 = vmatpush1.msra.mxu0 %v85
    %123 = vmatprep.subr.mxu0 0.0
    %124 = vmatpush1.msra.mxu0 %v84
    %125 = vmatprep.subr.mxu0 0.0
    %126 = vmatpush1.msra.mxu0 %v83
    %127 = vmatprep.subr.mxu0 0.0
    %128 = vmatpush1.msra.mxu0 %v82
    %129 = vmatprep.subr.mxu0 0.0
    %130 = vmatpush1.msra.mxu0 %v81
    %131 = vmatprep.subr.mxu0 0.0
    %132 = vmatpush1.msra.mxu0 %v80
    %133 = vmatprep.subr.mxu0 0.0
    %134 = vmatpush1.msra.mxu0 %v79
    %135 = vmatprep.subr.mxu0 0.0
    %136 = vmatpush1.msra.mxu0 %v78
    %137 = vmatprep.subr.mxu0 0.0
    %138 = vmatpush1.msra.mxu0 %v77
    %139 = vmatprep.subr.mxu0 0.0
    %140 = vmatpush1.msra.mxu0 %v76
    %141 = vmatprep.subr.mxu0 0.0
    %142 = vmatpush1.msra.mxu0 %v75
    %143 = vmatprep.subr.mxu0 0.0
    %144 = vmatpush2.msra.mxu0 %v106
    %145 = vmatprep.subr.mxu0 0.0
    %146 = vmatpush2.msra.mxu0 %v105
    %147 = vmatprep.subr.mxu0 0.0
    %148 = vmatpush2.msra.mxu0 %v104
    %149 = vmatprep.subr.mxu0 0.0
    %150 = vmatpush2.msra.mxu0 %v103
    %151 = vmatprep.subr.mxu0 0.0
    %152 = vmatpush2.msra.mxu0 %v102
    %153 = vmatprep.subr.mxu0 0.0
    %154 = vmatpush2.msra.mxu0 %v101
    %155 = vmatprep.subr.mxu0 0.0
    %156 = vmatpush2.msra.mxu0 %v100
    %157 = vmatprep.subr.mxu0 0.0
    %158 = vmatpush2.msra.mxu0 %v99
    %159 = vmatprep.subr.mxu0 0.0
    %160 = vmatpush2.msra.mxu0 %v98
    %161 = vmatprep.subr.mxu0 0.0
    %162 = vmatpush2.msra.mxu0 %v97
    %163 = vmatprep.subr.mxu0 0.0
    %164 = vmatpush2.msra.mxu0 %v96
    %165 = vmatprep.subr.mxu0 0.0
    %166 = vmatpush2.msra.mxu0 %v95
    %167 = vmatprep.subr.mxu0 0.0
    %168 = vmatpush2.msra.mxu0 %v94
    %169 = vmatprep.subr.mxu0 0.0
    %170 = vmatpush2.msra.mxu0 %v93
    %171 = vmatprep.subr.mxu0 0.0
    %172 = vmatpush2.msra.mxu0 %v92
    %173 = vmatprep.subr.mxu0 0.0
    %174 = vmatpush2.msra.mxu0 %v91
    %175 = vmatprep.mubr.f32.mxu0 %v74
    %176 = vmatmul.mubr.f32.gmra.mxu0 %v73
    %v177 = vpop.f32.mrf.mxu0
    %v178 = vadd.f32 %v110, %v177
    %v179 = vpop.f32.mrf.mxu0
    %180 = vdwg.mxu0
    %v181 = vrot.slane %v178, 4
    %v182 = vadd.f32 %v178, %v181
    %v183 = vrot.slane %v182, 2
    %v184 = vadd.f32 %v182, %v183
    %v185 = vrot.slane %v184, 1
    %v186 = vadd.f32 %v184, %v185
    %v187 = vmul.f32 %v178, %v178
    %v188 = vrot.slane %v187, 4
    %v189 = vadd.f32 %v187, %v188
    %v190 = vrot.slane %v189, 2
    %v191 = vadd.f32 %v189, %v190
    %v192 = vrot.slane %v191, 1
    %v193 = vadd.f32 %v191, %v192
    %v194 = vmul.f32 %v186, 0.125
    %v195 = vmul.f32 %v193, 0.125
    %v196 = vmul.f32 %v194, %v194
    %v197 = vsub.f32 %v195, %v196
    %v198 = vmax.f32 %v197, 0.0
    %v199 = vsub.f32 %v178, %v194
    %v200 = vadd.f32 %v198, 1e-05
    %v201 = vrsqrt.pop %v200
    %v202 = vmul.f32 %v199, %v201
    %v203 = vlaneseq
    %v204 = vshrl.u32 %v203, 7
    %v205 = vsub.s32 1, %v204
    %v206 = vrot.slane %v71, %v205
    %v207 = vmul.f32 %v202, %v206
    %v208 = vlaneseq
    %v209 = vshrl.u32 %v208, 7
    %v210 = vsub.s32 2, %v209
    %v211 = vrot.slane %v71, %v210
    %v212 = vadd.f32 %v207, %v211
    %v213 = vmax.f32 %v212, 0.0
    %v214 = vld [vmem:[#allocation7] sm:$0xff]
    %v215 = vld [vmem:[#allocation7 + $0x8] sm:$0xff]
    %v216 = vld [vmem:[#allocation7 + $0x10] sm:$0xff]
    %v217 = vld [vmem:[#allocation7 + $0x18] sm:$0xff]
    %v218 = vld [vmem:[#allocation7 + $0x20] sm:$0xff]
    %v219 = vld [vmem:[#allocation7 + $0x28] sm:$0xff]
    %v220 = vld [vmem:[#allocation7 + $0x30] sm:$0xff]
    %v221 = vld [vmem:[#allocation7 + $0x38] sm:$0xff]
    %v222 = vld [vmem:[#allocation7 + $0x40] sm:$0xff]
    %v223 = vld [vmem:[#allocation7 + $0x48] sm:$0xff]
    %v224 = vld [vmem:[#allocation7 + $0x50] sm:$0xff]
    %v225 = vld [vmem:[#allocation7 + $0x58] sm:$0xff]
    %v226 = vld [vmem:[#allocation7 + $0x60] sm:$0xff]
    %v227 = vld [vmem:[#allocation7 + $0x68] sm:$0xff]
    %v228 = vld [vmem:[#allocation7 + $0x70] sm:$0xff]
    %v229 = vld [vmem:[#allocation7 + $0x78] sm:$0xff]
    %v230 = vlaneseq
    %v231 = vshrl.u32 %v230, 7
    %v232 = vsub.s32 3, %v231
    %v233 = vrot.slane %v71, %v232
    %234 = vmatprep.subr.mxu0 0.0
    %235 = vmatpush1.msra.mxu0 %v229
    %236 = vmatprep.subr.mxu0 0.0
    %237 = vmatpush1.msra.mxu0 %v228
    %238 = vmatprep.subr.mxu0 0.0
    %239 = vmatpush1.msra.mxu0 %v227
    %240 = vmatprep.subr.mxu0 0.0
    %241 = vmatpush1.msra.mxu0 %v226
    %242 = vmatprep.subr.mxu0 0.0
    %243 = vmatpush1.msra.mxu0 %v225
    %244 = vmatprep.subr.mxu0 0.0
    %245 = vmatpush1.msra.mxu0 %v224
    %246 = vmatprep.subr.mxu0 0.0
    %247 = vmatpush1.msra.mxu0 %v223
    %248 = vmatprep.subr.mxu0 0.0
    %249 = vmatpush1.msra.mxu0 %v222
    %250 = vmatprep.subr.mxu0 0.0
    %251 = vmatpush1.msra.mxu0 %v221
    %252 = vmatprep.subr.mxu0 0.0
    %253 = vmatpush1.msra.mxu0 %v220
    %254 = vmatprep.subr.mxu0 0.0
    %255 = vmatpush1.msra.mxu0 %v219
    %256 = vmatprep.subr.mxu0 0.0
    %257 = vmatpush1.msra.mxu0 %v218
    %258 = vmatprep.subr.mxu0 0.0
    %259 = vmatpush1.msra.mxu0 %v217
    %260 = vmatprep.subr.mxu0 0.0
    %261 = vmatpush1.msra.mxu0 %v216
    %262 = vmatprep.subr.mxu0 0.0
    %263 = vmatpush1.msra.mxu0 %v215
    %264 = vmatprep.subr.mxu0 0.0
    %265 = vmatpush1.msra.mxu0 %v214
    %266 = vmatprep.subr.mxu0 0.0
    %267 = vmatpush2.msra.mxu0 0.0
    %268 = vmatprep.subr.mxu0 0.0
    %269 = vmatpush2.msra.mxu0 0.0
    %270 = vmatprep.subr.mxu0 0.0
    %271 = vmatpush2.msra.mxu0 0.0
    %272 = vmatprep.subr.mxu0 0.0
    %273 = vmatpush2.msra.mxu0 0.0
    %274 = vmatprep.subr.mxu0 0.0
    %275 = vmatpush2.msra.mxu0 0.0
    %276 = vmatprep.subr.mxu0 0.0
    %277 = vmatpush2.msra.mxu0 0.0
    %278 = vmatprep.subr.mxu0 0.0
    %279 = vmatpush2.msra.mxu0 0.0
    %280 = vmatprep.subr.mxu0 0.0
    %281 = vmatpush2.msra.mxu0 0.0
    %282 = vmatprep.subr.mxu0 0.0
    %283 = vmatpush2.msra.mxu0 0.0
    %284 = vmatprep.subr.mxu0 0.0
    %285 = vmatpush2.msra.mxu0 0.0
    %286 = vmatprep.subr.mxu0 0.0
    %287 = vmatpush2.msra.mxu0 0.0
    %288 = vmatprep.subr.mxu0 0.0
    %289 = vmatpush2.msra.mxu0 0.0
    %290 = vmatprep.subr.mxu0 0.0
    %291 = vmatpush2.msra.mxu0 0.0
    %292 = vmatprep.subr.mxu0 0.0
    %293 = vmatpush2.msra.mxu0 0.0
    %294 = vmatprep.subr.mxu0 0.0
    %295 = vmatpush2.msra.mxu0 0.0
    %296 = vmatprep.subr.mxu0 0.0
    %297 = vmatpush2.msra.mxu0 0.0
    %298 = vmatprep.mubr.f32.mxu0 0.0
    %299 = vmatmul.mubr.f32.gmra.mxu0 %v213
    %v300 = vpop.f32.mrf.mxu0
    %v301 = vadd.f32 %v233, %v300
    %v302 = vpop.f32.mrf.mxu0
    %303 = vdwg.mxu0
    %v304 = vrot.slane %v301, 4
    %v305 = vadd.f32 %v301, %v304
    %v306 = vrot.slane %v305, 2
    %v307 = vadd.f32 %v305, %v306
    %v308 = vrot.slane %v307, 1
    %v309 = vadd.f32 %v307, %v308
    %v310 = vmul.f32 %v301, %v301
    %v311 = vrot.slane %v310, 4
    %v312 = vadd.f32 %v310, %v311
    %v313 = vrot.slane %v312, 2
    %v314 = vadd.f32 %v312, %v313
    %v315 = vrot.slane %v314, 1
    %v316 = vadd.f32 %v314, %v315
    %v317 = vmul.f32 %v309, 0.125
    %v318 = vmul.f32 %v316, 0.125
    %v319 = vmul.f32 %v317, %v317
    %v320 = vsub.f32 %v318, %v319
    %v321 = vmax.f32 %v320, 0.0
    %v322 = vsub.f32 %v301, %v317
    %v323 = vadd.f32 %v321, 1e-05
    %v324 = vrsqrt.pop %v323
    %v325 = vmul.f32 %v322, %v324
    %v326 = vlaneseq
    %v327 = vshrl.u32 %v326, 7
    %v328 = vsub.s32 4, %v327
    %v329 = vrot.slane %v71, %v328
    %v330 = vmul.f32 %v325, %v329
    %v331 = vlaneseq
    %v332 = vshrl.u32 %v331, 7
    %v333 = vsub.s32 5, %v332
    %v334 = vrot.slane %v71, %v333
    %v335 = vadd.f32 %v330, %v334
    %v336 = vmax.f32 %v335, 0.0
    %s337 = scalar_lea.vmem [#allocation7], 128
    %v338 = vld [vmem:[%s337] sm:$0xff]
    %v339 = vld [vmem:[%s337 + $0x8] sm:$0xff]
    %v340 = vld [vmem:[%s337 + $0x10] sm:$0xff]
    %v341 = vld [vmem:[%s337 + $0x18] sm:$0xff]
    %v342 = vld [vmem:[%s337 + $0x20] sm:$0xff]
    %v343 = vld [vmem:[%s337 + $0x28] sm:$0xff]
    %v344 = vld [vmem:[%s337 + $0x30] sm:$0xff]
    %v345 = vld [vmem:[%s337 + $0x38] sm:$0xff]
    %v346 = vld [vmem:[%s337 + $0x40] sm:$0xff]
    %v347 = vld [vmem:[%s337 + $0x48] sm:$0xff]
    %v348 = vld [vmem:[%s337 + $0x50] sm:$0xff]
    %v349 = vld [vmem:[%s337 + $0x58] sm:$0xff]
    %v350 = vld [vmem:[%s337 + $0x60] sm:$0xff]
    %v351 = vld [vmem:[%s337 + $0x68] sm:$0xff]
    %v352 = vld [vmem:[%s337 + $0x70] sm:$0xff]
    %v353 = vld [vmem:[%s337 + $0x78] sm:$0xff]
    %v354 = vlaneseq
    %v355 = vshrl.u32 %v354, 7
    %v356 = vsub.s32 6, %v355
    %v357 = vrot.slane %v71, %v356
    %358 = vmatprep.subr.mxu0 0.0
    %359 = vmatpush1.msra.mxu0 %v353
    %360 = vmatprep.subr.mxu0 0.0
    %361 = vmatpush1.msra.mxu0 %v352
    %362 = vmatprep.subr.mxu0 0.0
    %363 = vmatpush1.msra.mxu0 %v351
    %364 = vmatprep.subr.mxu0 0.0
    %365 = vmatpush1.msra.mxu0 %v350
    %366 = vmatprep.subr.mxu0 0.0
    %367 = vmatpush1.msra.mxu0 %v349
    %368 = vmatprep.subr.mxu0 0.0
    %369 = vmatpush1.msra.mxu0 %v348
    %370 = vmatprep.subr.mxu0 0.0
    %371 = vmatpush1.msra.mxu0 %v347
    %372 = vmatprep.subr.mxu0 0.0
    %373 = vmatpush1.msra.mxu0 %v346
    %374 = vmatprep.subr.mxu0 0.0
    %375 = vmatpush1.msra.mxu0 %v345
    %376 = vmatprep.subr.mxu0 0.0
    %377 = vmatpush1.msra.mxu0 %v344
    %378 = vmatprep.subr.mxu0 0.0
    %379 = vmatpush1.msra.mxu0 %v343
    %380 = vmatprep.subr.mxu0 0.0
    %381 = vmatpush1.msra.mxu0 %v342
    %382 = vmatprep.subr.mxu0 0.0
    %383 = vmatpush1.msra.mxu0 %v341
    %384 = vmatprep.subr.mxu0 0.0
    %385 = vmatpush1.msra.mxu0 %v340
    %386 = vmatprep.subr.mxu0 0.0
    %387 = vmatpush1.msra.mxu0 %v339
    %388 = vmatprep.subr.mxu0 0.0
    %389 = vmatpush1.msra.mxu0 %v338
    %390 = vmatprep.subr.mxu0 0.0
    %391 = vmatpush2.msra.mxu0 0.0
    %392 = vmatprep.subr.mxu0 0.0
    %393 = vmatpush2.msra.mxu0 0.0
    %394 = vmatprep.subr.mxu0 0.0
    %395 = vmatpush2.msra.mxu0 0.0
    %396 = vmatprep.subr.mxu0 0.0
    %397 = vmatpush2.msra.mxu0 0.0
    %398 = vmatprep.subr.mxu0 0.0
    %399 = vmatpush2.msra.mxu0 0.0
    %400 = vmatprep.subr.mxu0 0.0
    %401 = vmatpush2.msra.mxu0 0.0
    %402 = vmatprep.subr.mxu0 0.0
    %403 = vmatpush2.msra.mxu0 0.0
    %404 = vmatprep.subr.mxu0 0.0
    %405 = vmatpush2.msra.mxu0 0.0
    %406 = vmatprep.subr.mxu0 0.0
    %407 = vmatpush2.msra.mxu0 0.0
    %408 = vmatprep.subr.mxu0 0.0
    %409 = vmatpush2.msra.mxu0 0.0
    %410 = vmatprep.subr.mxu0 0.0
    %411 = vmatpush2.msra.mxu0 0.0
    %412 = vmatprep.subr.mxu0 0.0
    %413 = vmatpush2.msra.mxu0 0.0
    %414 = vmatprep.subr.mxu0 0.0
    %415 = vmatpush2.msra.mxu0 0.0
    %416 = vmatprep.subr.mxu0 0.0
    %417 = vmatpush2.msra.mxu0 0.0
    %418 = vmatprep.subr.mxu0 0.0
    %419 = vmatpush2.msra.mxu0 0.0
    %420 = vmatprep.subr.mxu0 0.0
    %421 = vmatpush2.msra.mxu0 0.0
    %422 = vmatprep.mubr.f32.mxu0 0.0
    %423 = vmatmul.mubr.f32.gmra.mxu0 %v336
    %v424 = vpop.f32.mrf.mxu0
    %v425 = vadd.f32 %v357, %v424
    %v426 = vpop.f32.mrf.mxu0
    %427 = vdwg.mxu0
    %v428 = vrot.slane %v425, 4
    %v429 = vadd.f32 %v425, %v428
    %v430 = vrot.slane %v429, 2
    %v431 = vadd.f32 %v429, %v430
    %v432 = vrot.slane %v431, 1
    %v433 = vadd.f32 %v431, %v432
    %v434 = vmul.f32 %v425, %v425
    %v435 = vrot.slane %v434, 4
    %v436 = vadd.f32 %v434, %v435
    %v437 = vrot.slane %v436, 2
    %v438 = vadd.f32 %v436, %v437
    %v439 = vrot.slane %v438, 1
    %v440 = vadd.f32 %v438, %v439
    %v441 = vmul.f32 %v433, 0.125
    %v442 = vmul.f32 %v440, 0.125
    %v443 = vmul.f32 %v441, %v441
    %v444 = vsub.f32 %v442, %v443
    %v445 = vmax.f32 %v444, 0.0
    %v446 = vsub.f32 %v425, %v441
    %v447 = vadd.f32 %v445, 1e-05
    %v448 = vrsqrt.pop %v447
    %v449 = vmul.f32 %v446, %v448
    %v450 = vlaneseq
    %v451 = vshrl.u32 %v450, 7
    %v452 = vsub.s32 7, %v451
    %v453 = vrot.slane %v71, %v452
    %v454 = vmul.f32 %v449, %v453
    %v455 = vlaneseq
    %v456 = vshrl.u32 %v455, 7
    %v457 = vsub.s32 0, %v456
    %v458 = vrot.slane %v72, %v457
    %v459 = vadd.f32 %v454, %v458
    %v460 = vmax.f32 %v459, 0.0
    %s461 = scalar_lea.vmem [#allocation7], 256
    %v462 = vld [vmem:[%s461] sm:$0xff]
    %v463 = vld [vmem:[%s461 + $0x8] sm:$0xff]
    %v464 = vld [vmem:[%s461 + $0x10] sm:$0xff]
    %v465 = vld [vmem:[%s461 + $0x18] sm:$0xff]
    %v466 = vld [vmem:[%s461 + $0x20] sm:$0xff]
    %v467 = vld [vmem:[%s461 + $0x28] sm:$0xff]
    %v468 = vld [vmem:[%s461 + $0x30] sm:$0xff]
    %v469 = vld [vmem:[%s461 + $0x38] sm:$0xff]
    %v470 = vld [vmem:[%s461 + $0x40] sm:$0xff]
    %v471 = vld [vmem:[%s461 + $0x48] sm:$0xff]
    %v472 = vld [vmem:[%s461 + $0x50] sm:$0xff]
    %v473 = vld [vmem:[%s461 + $0x58] sm:$0xff]
    %v474 = vld [vmem:[%s461 + $0x60] sm:$0xff]
    %v475 = vld [vmem:[%s461 + $0x68] sm:$0xff]
    %v476 = vld [vmem:[%s461 + $0x70] sm:$0xff]
    %v477 = vld [vmem:[%s461 + $0x78] sm:$0xff]
    %v478 = vlaneseq
    %v479 = vshrl.u32 %v478, 7
    %v480 = vsub.s32 1, %v479
    %v481 = vrot.slane %v72, %v480
    %482 = vmatprep.subr.mxu0 0.0
    %483 = vmatpush1.msra.mxu0 %v477
    %484 = vmatprep.subr.mxu0 0.0
    %485 = vmatpush1.msra.mxu0 %v476
    %486 = vmatprep.subr.mxu0 0.0
    %487 = vmatpush1.msra.mxu0 %v475
    %488 = vmatprep.subr.mxu0 0.0
    %489 = vmatpush1.msra.mxu0 %v474
    %490 = vmatprep.subr.mxu0 0.0
    %491 = vmatpush1.msra.mxu0 %v473
    %492 = vmatprep.subr.mxu0 0.0
    %493 = vmatpush1.msra.mxu0 %v472
    %494 = vmatprep.subr.mxu0 0.0
    %495 = vmatpush1.msra.mxu0 %v471
    %496 = vmatprep.subr.mxu0 0.0
    %497 = vmatpush1.msra.mxu0 %v470
    %498 = vmatprep.subr.mxu0 0.0
    %499 = vmatpush1.msra.mxu0 %v469
    %500 = vmatprep.subr.mxu0 0.0
    %501 = vmatpush1.msra.mxu0 %v468
    %502 = vmatprep.subr.mxu0 0.0
    %503 = vmatpush1.msra.mxu0 %v467
    %504 = vmatprep.subr.mxu0 0.0
    %505 = vmatpush1.msra.mxu0 %v466
    %506 = vmatprep.subr.mxu0 0.0
    %507 = vmatpush1.msra.mxu0 %v465
    %508 = vmatprep.subr.mxu0 0.0
    %509 = vmatpush1.msra.mxu0 %v464
    %510 = vmatprep.subr.mxu0 0.0
    %511 = vmatpush1.msra.mxu0 %v463
    %512 = vmatprep.subr.mxu0 0.0
    %513 = vmatpush1.msra.mxu0 %v462
    %514 = vmatprep.subr.mxu0 0.0
    %515 = vmatpush2.msra.mxu0 0.0
    %516 = vmatprep.subr.mxu0 0.0
    %517 = vmatpush2.msra.mxu0 0.0
    %518 = vmatprep.subr.mxu0 0.0
    %519 = vmatpush2.msra.mxu0 0.0
    %520 = vmatprep.subr.mxu0 0.0
    %521 = vmatpush2.msra.mxu0 0.0
    %522 = vmatprep.subr.mxu0 0.0
    %523 = vmatpush2.msra.mxu0 0.0
    %524 = vmatprep.subr.mxu0 0.0
    %525 = vmatpush2.msra.mxu0 0.0
    %526 = vmatprep.subr.mxu0 0.0
    %527 = vmatpush2.msra.mxu0 0.0
    %528 = vmatprep.subr.mxu0 0.0
    %529 = vmatpush2.msra.mxu0 0.0
    %530 = vmatprep.subr.mxu0 0.0
    %531 = vmatpush2.msra.mxu0 0.0
    %532 = vmatprep.subr.mxu0 0.0
    %533 = vmatpush2.msra.mxu0 0.0
    %534 = vmatprep.subr.mxu0 0.0
    %535 = vmatpush2.msra.mxu0 0.0
    %536 = vmatprep.subr.mxu0 0.0
    %537 = vmatpush2.msra.mxu0 0.0
    %538 = vmatprep.subr.mxu0 0.0
    %539 = vmatpush2.msra.mxu0 0.0
    %540 = vmatprep.subr.mxu0 0.0
    %541 = vmatpush2.msra.mxu0 0.0
    %542 = vmatprep.subr.mxu0 0.0
    %543 = vmatpush2.msra.mxu0 0.0
    %544 = vmatprep.subr.mxu0 0.0
    %545 = vmatpush2.msra.mxu0 0.0
    %546 = vmatprep.mubr.f32.mxu0 0.0
    %547 = vmatmul.mubr.f32.gmra.mxu0 %v460
    %v548 = vpop.f32.mrf.mxu0
    %v549 = vadd.f32 %v481, %v548
    %v550 = vpop.f32.mrf.mxu0
    %551 = vdwg.mxu0
    %552 = vst [vmem:[#allocation10] sm:$0xff] %v549
    // Predicated region
    $region34: #{tpu_custom_call.1} parent=1 // pred_check
      _
    $region35: #{tpu_custom_call.1} parent=1 // pred_check_branch
      %554 = sbr.rel (0) target = $region37
    $region36: #{tpu_custom_call.1} parent=1 // pred_region
      %s556 = ssub.s32 128, 128
      %557 = vsyncadd [#allocation4], %s556
      %s559 = sshll.u32 [#allocation10], 4
      %s560 = int_to_ptr.vmem [resolvable:$true] %s559
      %562 = dma.vmem_to_hbm [thread:$0]  %s560, 128, %s4, [#allocation4]
    $region37: #{tpu_custom_call.1} parent=1 // pred_fallthru
      _
    // Predicated region
    $region38: #{tpu_custom_call.1} parent=1 // pred_check
      _
    $region39: #{tpu_custom_call.1} parent=1 // pred_check_branch
      %564 = sbr.rel (0) target = $region41
    $region40: #{tpu_custom_call.1} parent=1 // pred_region
      %565 = dma.done [#allocation4], 128
    $region41: #{tpu_custom_call.1} parent=1 // pred_fallthru
      _
    %566 = vsyncpa [#allocation3], 1
    %567 = vsyncpa [#allocation6], 1
    %568 = vsyncpa [#allocation9], 1
    %569 = vsyncpa [#allocation4], 1

</llo_original>
